<compile_context>
chip_gen: v6e
topology: v6e:2x2x1
jax: 0.10.0
libtpu: 0.0.40
codegen_flags: <defaults>
</compile_context>

<pallas_src>
import jax
import jax.numpy as jnp
from jax import lax
from jax.experimental import pallas as pl
from jax.experimental.pallas import tpu as pltpu


def _vmem_bytes_estimate(HW, C, C8, TQ):
    """Rough per-step VMEM working-set estimate (bytes)."""
    x_bytes = 2 * HW * C * 4                       # x block, f32, double-buffered
    out_bytes = 2 * TQ * C * 4                     # out block, f32, double-buffered
    w_bytes = 2 * (C * 2 * C8 * 2 + C * C * 2 + 2 * C8 * 4 + C * 4)  # weights/biases
    scratch = 2 * HW * C8 * 2 + HW * C * 2         # q/k/v scratch, bf16
    temps = 2 * TQ * HW * 4 + TQ * HW * 2 + 4 * TQ * C * 4  # energy/exp (+bf16 copy)
    return x_bytes + out_bytes + w_bytes + scratch + temps


def _pick_tq(HW, C, C8, budget=40 * 1024 * 1024):
    """Largest convenient query-tile that divides HW and fits the VMEM budget."""
    tq = HW
    for cand in (512, 256, 128, 64, 32, 16, 8):
        if cand <= HW and HW % cand == 0:
            tq = cand
            break
    while tq > 8 and HW % (tq // 2) == 0 and _vmem_bytes_estimate(HW, C, C8, tq) > budget:
        tq //= 2
    return tq


def _pam_kernel(x_ref, wqk_ref, bqk_ref, wv_ref, bv_ref, gamma_ref, out_ref,
                q_s, k_s, v_s):
    # x_ref:   (HW, C)  f32   — full batch element (block index constant in qt)
    # wqk_ref: (C, 2*C8) bf16 — fused query|key projection weights
    # bqk_ref: (1, 2*C8) f32
    # wv_ref:  (C, C)   bf16
    # bv_ref:  (1, C)   f32
    # gamma_ref: (1, 1) f32 in SMEM
    # out_ref: (TQ, C)  f32   — current query tile
    # q_s/k_s: (HW, C8) bf16 scratch, v_s: (HW, C) bf16 scratch
    qt = pl.program_id(1)
    C8 = q_s.shape[1]
    TQ = out_ref.shape[0]

    # --- once per batch element: project Q, K (fused, lane-dense) and V ------
    @pl.when(qt == 0)
    def _project_qkv():
        x_bf = x_ref[...].astype(jnp.bfloat16)                       # (HW, C)
        qk = jnp.dot(x_bf, wqk_ref[...],
                     preferred_element_type=jnp.float32) + bqk_ref[...]   # (HW, 2*C8)
        q_s[...] = qk[:, :C8].astype(jnp.bfloat16)
        k_s[...] = qk[:, C8:].astype(jnp.bfloat16)
        v = jnp.dot(x_bf, wv_ref[...],
                    preferred_element_type=jnp.float32) + bv_ref[...]     # (HW, C)
        v_s[...] = v.astype(jnp.bfloat16)

    # --- per query tile: energy -> softmax(exp) -> PV -> late normalize ------
    row0 = pl.multiple_of(qt * TQ, TQ)
    q = q_s[pl.ds(row0, TQ), :]                                      # (TQ, C8) bf16

    # energy[i, j] = <q_i, k_j>  (NT contraction, no explicit transpose)
    energy = lax.dot_general(
        q, k_s[...],
        dimension_numbers=(((1,), (1,)), ((), ())),
        preferred_element_type=jnp.float32)                          # (TQ, HW) f32

    m = jnp.max(energy, axis=-1, keepdims=True)                      # (TQ, 1)
    e = jnp.exp(energy - m)                                          # (TQ, HW)
    denom = jnp.sum(e, axis=-1, keepdims=True)                       # (TQ, 1)

    # Un-normalized PV matmul; softmax 1/denom (and gamma) are folded into the
    # small (TQ, C) result instead of the big (TQ, HW) probability slab.
    out_unnorm = jnp.dot(e.astype(jnp.bfloat16), v_s[...],
                         preferred_element_type=jnp.float32)         # (TQ, C) f32

    gamma = gamma_ref[0, 0]
    scale = gamma * pl.reciprocal(denom, approx=True)                # (TQ, 1)
    x_tile = x_ref[pl.ds(row0, TQ), :]                               # (TQ, C) f32
    out_ref[...] = out_unnorm * scale + x_tile


def pam_forward(x_nchw, wq, bq, wk, bk, wv, bv, gamma):
    """x_nchw: (N, C, H, W) f32.
    wq/wk: (C, C//8), bq/bk: (1, C//8), wv: (C, C), bv: (1, C), gamma: (1, 1)."""
    N, C, H, W = x_nchw.shape
    HW = H * W
    C8 = wq.shape[1]

    # NCHW -> (N, HW, C) token layout (glue, not the hot path).
    x_tok = jnp.transpose(x_nchw.reshape(N, C, HW), (0, 2, 1))

    # Fuse Q|K projections into one lane-dense matmul; cast weights to bf16.
    wqk = jnp.concatenate([wq, wk], axis=1).astype(jnp.bfloat16)     # (C, 2*C8)
    bqk = jnp.concatenate([bq, bk], axis=1).astype(jnp.float32)      # (1, 2*C8)
    wv_bf = wv.astype(jnp.bfloat16)
    gamma = gamma.astype(jnp.float32).reshape(1, 1)

    TQ = _pick_tq(HW, C, C8)
    num_qt = HW // TQ
    vmem_limit = int(min(max(_vmem_bytes_estimate(HW, C, C8, TQ) * 5 // 4,
                             32 * 1024 * 1024),
                         48 * 1024 * 1024))

    full = lambda b, qt: (0, 0)

    out_tok = pl.pallas_call(
        _pam_kernel,
        out_shape=jax.ShapeDtypeStruct((N, HW, C), jnp.float32),
        grid_spec=pltpu.PrefetchScalarGridSpec(
            num_scalar_prefetch=0,
            grid=(N, num_qt),
            in_specs=[
                # x: full batch element; block index constant in qt so the DMA
                # is only issued when b changes.
                pl.BlockSpec((None, HW, C), lambda b, qt: (b, 0, 0)),
                pl.BlockSpec((C, 2 * C8), full),    # wqk (bf16)
                pl.BlockSpec((1, 2 * C8), full),    # bqk (f32)
                pl.BlockSpec((C, C), full),         # wv  (bf16)
                pl.BlockSpec((1, C), full),         # bv  (f32)
                pl.BlockSpec(memory_space=pltpu.MemorySpace.SMEM),   # gamma scalar
            ],
            out_specs=pl.BlockSpec((None, TQ, C), lambda b, qt: (b, qt, 0)),
            scratch_shapes=[
                pltpu.VMEM((HW, C8), jnp.bfloat16),   # Q cache
                pltpu.VMEM((HW, C8), jnp.bfloat16),   # K cache
                pltpu.VMEM((HW, C), jnp.bfloat16),    # V cache
            ],
        ),
        compiler_params=pltpu.CompilerParams(
            dimension_semantics=("parallel", "arbitrary"),
            vmem_limit_bytes=vmem_limit,
        ),
    )(x_tok, wqk, bqk, wv_bf, bv.astype(jnp.float32), gamma)

    # (N, HW, C) -> NCHW
    return jnp.transpose(out_tok, (0, 2, 1)).reshape(N, C, H, W)


def pam_reference(x_nchw, wq, bq, wk, bk, wv, bv, gamma):
    """Pure-JAX f32 reference mirroring the PyTorch forward."""
    N, C, H, W = x_nchw.shape
    HW = H * W
    x_tok = jnp.transpose(x_nchw.reshape(N, C, HW), (0, 2, 1))       # (N, HW, C)
    q = x_tok @ wq + bq                                              # (N, HW, C8)
    k = x_tok @ wk + bk
    v = x_tok @ wv + bv                                              # (N, HW, C)
    energy = jnp.einsum('nic,njc->nij', q, k)
    attn = jax.nn.softmax(energy, axis=-1)
    out_tok = jnp.einsum('nij,njc->nic', attn, v)
    out_tok = gamma[0, 0] * out_tok + x_tok
    return jnp.transpose(out_tok, (0, 2, 1)).reshape(N, C, H, W)


if __name__ == "__main__":
    # Small shapes consistent with the module: in_dim must be divisible by 8.
    N, C, H, W = 2, 16, 8, 8
    C8 = C // 8

    key = jax.random.PRNGKey(0)
    kx, kq, kbq, kk, kbk, kv, kbv = jax.random.split(key, 7)

    x = jax.random.normal(kx, (N, C, H, W), dtype=jnp.float32)

    # 1x1 conv weights stored directly in matmul form (C_in, C_out).
    wq = 0.1 * jax.random.normal(kq, (C, C8), dtype=jnp.float32)
    bq = 0.1 * jax.random.normal(kbq, (1, C8), dtype=jnp.float32)
    wk = 0.1 * jax.random.normal(kk, (C, C8), dtype=jnp.float32)
    bk = 0.1 * jax.random.normal(kbk, (1, C8), dtype=jnp.float32)
    wv = 0.1 * jax.random.normal(kv, (C, C), dtype=jnp.float32)
    bv = 0.1 * jax.random.normal(kbv, (1, C), dtype=jnp.float32)
    # gamma initialized to zero exactly as in the PyTorch module.
    gamma0 = jnp.zeros((1, 1), dtype=jnp.float32)

    out = pam_forward(x, wq, bq, wk, bk, wv, bv, gamma0)
    jax.block_until_ready(out)

    # gamma == 0: output must equal the input (residual only) — tight check.
    ref0 = pam_reference(x, wq, bq, wk, bk, wv, bv, gamma0)
    assert jnp.allclose(out, ref0, atol=1e-5, rtol=1e-5)

    # gamma != 0: attention path active; bf16 MXU inputs with f32 accumulation
    # → compare against the f32 reference with a bf16-appropriate tolerance.
    gamma1 = jnp.full((1, 1), 0.3, dtype=jnp.float32)
    out1 = pam_forward(x, wq, bq, wk, bk, wv, bv, gamma1)
    jax.block_until_ready(out1)
    ref1 = pam_reference(x, wq, bq, wk, bk, wv, bv, gamma1)
    assert jnp.allclose(out1, ref1, atol=2e-2, rtol=2e-2)

    print("KERNEL_OK")
</pallas_src>

<mosaic_0001>
module attributes {stable_mosaic.version = 11 : i64} {
  func.func @_pam_kernel(%arg0: i32, %arg1: i32, %arg2: memref<1x64x16xf32, #tpu.memory_space<vmem>>, %arg3: memref<16x4xbf16, #tpu.memory_space<vmem>>, %arg4: memref<1x4xf32, #tpu.memory_space<vmem>>, %arg5: memref<16x16xbf16, #tpu.memory_space<vmem>>, %arg6: memref<1x16xf32, #tpu.memory_space<vmem>>, %arg7: memref<1x1xf32, #tpu.memory_space<smem>>, %arg8: memref<1x64x16xf32, #tpu.memory_space<vmem>>, %arg9: memref<64x2xbf16, #tpu.memory_space<vmem>>, %arg10: memref<64x2xbf16, #tpu.memory_space<vmem>>, %arg11: memref<64x16xbf16, #tpu.memory_space<vmem>>) attributes {dimension_semantics = [#tpu.dimension_semantics<parallel>, #tpu.dimension_semantics<arbitrary>], iteration_bounds = array<i64: 2, 1>, scalar_prefetch = 0 : i64, scratch_operands = 3 : i64, tpu.core_type = #tpu.core_type<tc>, window_params = [{transform_indices = @transform_0, window_bounds = array<i64: 1, 64, 16>}, {pipeline_mode = #tpu.pipeline_mode<synchronous>, transform_indices = @transform_1, window_bounds = array<i64: 16, 4>}, {pipeline_mode = #tpu.pipeline_mode<synchronous>, transform_indices = @transform_2, window_bounds = array<i64: 1, 4>}, {pipeline_mode = #tpu.pipeline_mode<synchronous>, transform_indices = @transform_3, window_bounds = array<i64: 16, 16>}, {pipeline_mode = #tpu.pipeline_mode<synchronous>, transform_indices = @transform_4, window_bounds = array<i64: 1, 16>}, {transform_indices = @transform_5, window_bounds = array<i64: 1, 1>}, {transform_indices = @transform_6, window_bounds = array<i64: 1, 64, 16>}]} {
    %c0_i32 = arith.constant 0 : i32
    %0 = arith.cmpi eq, %arg1, %c0_i32 : i32
    %1 = arith.extui %0 : i1 to i32
    %c0_i32_0 = arith.constant 0 : i32
    %2 = arith.cmpi ne, %1, %c0_i32_0 : i32
    scf.if %2 {
      %c0_15 = arith.constant 0 : index
      %c0_16 = arith.constant 0 : index
      %c0_17 = arith.constant 0 : index
      %32 = vector.load %arg2[%c0_15, %c0_16, %c0_17] : memref<1x64x16xf32, #tpu.memory_space<vmem>>, vector<1x64x16xf32>
      %33 = vector.shape_cast %32 : vector<1x64x16xf32> to vector<64x16xf32>
      %34 = arith.truncf %33 : vector<64x16xf32> to vector<64x16xbf16>
      %c0_18 = arith.constant 0 : index
      %c0_19 = arith.constant 0 : index
      %35 = vector.load %arg3[%c0_18, %c0_19] : memref<16x4xbf16, #tpu.memory_space<vmem>>, vector<16x4xbf16>
      %cst_20 = arith.constant dense<0.000000e+00> : vector<64x4xf32>
      %36 = tpu.matmul %34, %35, %cst_20 {dimension_numbers = #tpu.dot_dimension_numbers<[1], [0], [0], [1], [0, 0, 1, 1], [], []>} : vector<64x16xbf16>, vector<16x4xbf16>, vector<64x4xf32> -> vector<64x4xf32>
      %c0_21 = arith.constant 0 : index
      %c0_22 = arith.constant 0 : index
      %37 = vector.load %arg4[%c0_21, %c0_22] : memref<1x4xf32, #tpu.memory_space<vmem>>, vector<1x4xf32>
      %38 = vector.broadcast %37 : vector<1x4xf32> to vector<64x4xf32>
      %39 = arith.addf %36, %38 : vector<64x4xf32>
      %40 = vector.extract_strided_slice %39 {offsets = [0, 0], sizes = [64, 2], strides = [1, 1]} : vector<64x4xf32> to vector<64x2xf32>
      %41 = arith.truncf %40 : vector<64x2xf32> to vector<64x2xbf16>
      %c0_23 = arith.constant 0 : index
      %c0_24 = arith.constant 0 : index
      %42 = vector.load %arg9[%c0_23, %c0_24] : memref<64x2xbf16, #tpu.memory_space<vmem>>, vector<64x2xbf16>
      tpu.vector_store %arg9[%c0_23, %c0_24], %41 {strides = array<i32>} : memref<64x2xbf16, #tpu.memory_space<vmem>>, vector<64x2xbf16>,
      %43 = vector.extract_strided_slice %39 {offsets = [0, 2], sizes = [64, 2], strides = [1, 1]} : vector<64x4xf32> to vector<64x2xf32>
      %44 = arith.truncf %43 : vector<64x2xf32> to vector<64x2xbf16>
      %c0_25 = arith.constant 0 : index
      %c0_26 = arith.constant 0 : index
      %45 = vector.load %arg10[%c0_25, %c0_26] : memref<64x2xbf16, #tpu.memory_space<vmem>>, vector<64x2xbf16>
      tpu.vector_store %arg10[%c0_25, %c0_26], %44 {strides = array<i32>} : memref<64x2xbf16, #tpu.memory_space<vmem>>, vector<64x2xbf16>,
      %c0_27 = arith.constant 0 : index
      %c0_28 = arith.constant 0 : index
      %46 = vector.load %arg5[%c0_27, %c0_28] : memref<16x16xbf16, #tpu.memory_space<vmem>>, vector<16x16xbf16>
      %cst_29 = arith.constant dense<0.000000e+00> : vector<64x16xf32>
      %47 = tpu.matmul %34, %46, %cst_29 {dimension_numbers = #tpu.dot_dimension_numbers<[1], [0], [0], [1], [0, 0, 1, 1], [], []>} : vector<64x16xbf16>, vector<16x16xbf16>, vector<64x16xf32> -> vector<64x16xf32>
      %c0_30 = arith.constant 0 : index
      %c0_31 = arith.constant 0 : index
      %48 = vector.load %arg6[%c0_30, %c0_31] : memref<1x16xf32, #tpu.memory_space<vmem>>, vector<1x16xf32>
      %49 = vector.broadcast %48 : vector<1x16xf32> to vector<64x16xf32>
      %50 = arith.addf %47, %49 : vector<64x16xf32>
      %51 = arith.truncf %50 : vector<64x16xf32> to vector<64x16xbf16>
      %c0_32 = arith.constant 0 : index
      %c0_33 = arith.constant 0 : index
      %52 = vector.load %arg11[%c0_32, %c0_33] : memref<64x16xbf16, #tpu.memory_space<vmem>>, vector<64x16xbf16>
      tpu.vector_store %arg11[%c0_32, %c0_33], %51 {strides = array<i32>} : memref<64x16xbf16, #tpu.memory_space<vmem>>, vector<64x16xbf16>,
    } else {
    }
    %c64_i32 = arith.constant 64 : i32
    %3 = arith.muli %arg1, %c64_i32 : i32
    %4 = tpu.assume_multiple %3, 64 : i32
    %5 = arith.index_cast %4 : i32 to index
    %c0 = arith.constant 0 : index
    %6 = vector.load %arg9[%5, %c0] : memref<64x2xbf16, #tpu.memory_space<vmem>>, vector<64x2xbf16>
    %c0_1 = arith.constant 0 : index
    %c0_2 = arith.constant 0 : index
    %7 = vector.load %arg10[%c0_1, %c0_2] : memref<64x2xbf16, #tpu.memory_space<vmem>>, vector<64x2xbf16>
    %cst = arith.constant dense<0.000000e+00> : vector<64x64xf32>
    %8 = tpu.matmul %6, %7, %cst {dimension_numbers = #tpu.dot_dimension_numbers<[1], [1], [0], [0], [0, 0, 1, 0], [], []>} : vector<64x2xbf16>, vector<64x2xbf16>, vector<64x64xf32> -> vector<64x64xf32>
    %cst_3 = arith.constant dense<0xFF800000> : vector<64xf32>
    %9 = vector.multi_reduction <maximumf>, %8, %cst_3 [1] : vector<64x64xf32> to vector<64xf32>
    %10 = vector.shape_cast %9 : vector<64xf32> to vector<64x1xf32>
    %11 = vector.broadcast %10 : vector<64x1xf32> to vector<64x64xf32>
    %12 = arith.subf %8, %11 : vector<64x64xf32>
    %13 = math.exp %12 : vector<64x64xf32>
    %cst_4 = arith.constant dense<0.000000e+00> : vector<64xf32>
    %14 = vector.multi_reduction <add>, %13, %cst_4 [1] : vector<64x64xf32> to vector<64xf32>
    %15 = vector.shape_cast %14 : vector<64xf32> to vector<64x1xf32>
    %16 = arith.truncf %13 : vector<64x64xf32> to vector<64x64xbf16>
    %c0_5 = arith.constant 0 : index
    %c0_6 = arith.constant 0 : index
    %17 = vector.load %arg11[%c0_5, %c0_6] : memref<64x16xbf16, #tpu.memory_space<vmem>>, vector<64x16xbf16>
    %cst_7 = arith.constant dense<0.000000e+00> : vector<64x16xf32>
    %18 = tpu.matmul %16, %17, %cst_7 {dimension_numbers = #tpu.dot_dimension_numbers<[1], [0], [0], [1], [0, 0, 1, 1], [], []>} : vector<64x64xbf16>, vector<64x16xbf16>, vector<64x16xf32> -> vector<64x16xf32>
    %c0_8 = arith.constant 0 : index
    %c0_9 = arith.constant 0 : index
    %19 = memref.load %arg7[%c0_8, %c0_9] : memref<1x1xf32, #tpu.memory_space<smem>>
    %20 = tpu.reciprocal %15 {approx = true} : vector<64x1xf32> -> vector<64x1xf32>
    %21 = vector.broadcast %19 : f32 to vector<64x1xf32>
    %22 = arith.mulf %21, %20 : vector<64x1xf32>
    %c0_10 = arith.constant 0 : index
    %23 = arith.index_cast %4 : i32 to index
    %c0_11 = arith.constant 0 : index
    %24 = vector.load %arg2[%c0_10, %23, %c0_11] : memref<1x64x16xf32, #tpu.memory_space<vmem>>, vector<1x64x16xf32>
    %25 = vector.shape_cast %24 : vector<1x64x16xf32> to vector<64x16xf32>
    %26 = vector.broadcast %22 : vector<64x1xf32> to vector<64x16xf32>
    %27 = arith.mulf %18, %26 : vector<64x16xf32>
    %28 = arith.addf %27, %25 : vector<64x16xf32>
    %c0_12 = arith.constant 0 : index
    %c0_13 = arith.constant 0 : index
    %c0_14 = arith.constant 0 : index
    %29 = vector.load %arg8[%c0_12, %c0_13, %c0_14] : memref<1x64x16xf32, #tpu.memory_space<vmem>>, vector<1x64x16xf32>
    %30 = vector.shape_cast %29 : vector<1x64x16xf32> to vector<64x16xf32>
    %31 = vector.shape_cast %28 : vector<64x16xf32> to vector<1x64x16xf32>
    tpu.vector_store %arg8[%c0_12, %c0_13, %c0_14], %31 {strides = array<i32>} : memref<1x64x16xf32, #tpu.memory_space<vmem>>, vector<1x64x16xf32>,
    return
  }
  func.func @transform_0(%arg0: i32, %arg1: i32) -> (i32, i32, i32) {
    %c0_i32 = arith.constant 0 : i32
    %c0_i32_0 = arith.constant 0 : i32
    %c0_i32_1 = arith.constant 0 : i32
    return %arg0, %c0_i32, %c0_i32_0 : i32, i32, i32
  }
  func.func @transform_1(%arg0: i32, %arg1: i32) -> (i32, i32) {
    %c0_i32 = arith.constant 0 : i32
    %c0_i32_0 = arith.constant 0 : i32
    %c0_i32_1 = arith.constant 0 : i32
    return %c0_i32, %c0_i32_0 : i32, i32
  }
  func.func @transform_2(%arg0: i32, %arg1: i32) -> (i32, i32) {
    %c0_i32 = arith.constant 0 : i32
    %c0_i32_0 = arith.constant 0 : i32
    %c0_i32_1 = arith.constant 0 : i32
    return %c0_i32, %c0_i32_0 : i32, i32
  }
  func.func @transform_3(%arg0: i32, %arg1: i32) -> (i32, i32) {
    %c0_i32 = arith.constant 0 : i32
    %c0_i32_0 = arith.constant 0 : i32
    %c0_i32_1 = arith.constant 0 : i32
    return %c0_i32, %c0_i32_0 : i32, i32
  }
  func.func @transform_4(%arg0: i32, %arg1: i32) -> (i32, i32) {
    %c0_i32 = arith.constant 0 : i32
    %c0_i32_0 = arith.constant 0 : i32
    %c0_i32_1 = arith.constant 0 : i32
    return %c0_i32, %c0_i32_0 : i32, i32
  }
  func.func @transform_5(%arg0: i32, %arg1: i32) -> (i32, i32) {
    %c0_i32 = arith.constant 0 : i32
    %c0_i32_0 = arith.constant 0 : i32
    %c0_i32_1 = arith.constant 0 : i32
    return %c0_i32, %c0_i32_0 : i32, i32
  }
  func.func @transform_6(%arg0: i32, %arg1: i32) -> (i32, i32, i32) {
    %c0_i32 = arith.constant 0 : i32
    %c0_i32_0 = arith.constant 0 : i32
    return %arg0, %arg1, %c0_i32 : i32, i32, i32
  }
}

</mosaic_0001>

<llo_original>
// kernel: tpu_custom_call.1
$region0: #{tpu_custom_call.1}
  #allocation0 [shape = 'u32[]', space=smem, size = 0x4, offset = 0x4, fixed_abs, tag = 'smem constant byte address 0x4 - core index']
  #allocation1 [shape = 'u32[144,128]{1,0:T(1,128)}', space=vmem, size = 0x12000, scoped, tag = 'internal scratch']
  #allocation2 [shape = 'bf16[64,2]{1,0:T(8,128)(2,1)}', space=vmem, size = 0x4000, scoped, tag = 'scratch operand']
  #allocation3 [shape = 'bf16[64,2]{1,0:T(8,128)(2,1)}', space=vmem, size = 0x4000, scoped, tag = 'scratch operand']
  #allocation4 [shape = 'bf16[64,16]{1,0:T(8,128)(2,1)}', space=vmem, size = 0x4000, scoped, tag = 'scratch operand']
  #allocation5 [shape = 'f32[1,1]{1,0:T(1,128)S(6)}', space=smem, size = 0x200, scoped, tag = 'scoped memory for tpu_custom_call.1']
  %s0 = inlined_call_operand.vmem [shape: f32[2,64,16], index: 0, kind: input, shape index: {}]
  %s1 = inlined_call_operand.vmem [shape: bf16[16,4], index: 1, kind: input, shape index: {}]
  %s2 = inlined_call_operand.vmem [shape: f32[1,4], index: 2, kind: input, shape index: {}]
  %s3 = inlined_call_operand.vmem [shape: bf16[16,16], index: 3, kind: input, shape index: {}]
  %s4 = inlined_call_operand.vmem [shape: f32[1,16], index: 4, kind: input, shape index: {}]
  %s5 = inlined_call_operand.<no memory space> [shape: f32[1,1], index: 5, kind: input, shape index: {}]
  %s6 = inlined_call_operand.vmem [shape: f32[2,64,16], index: 6, kind: output, shape index: {}]
  %s7 = sld [smem:[#allocation0]]
  $region61: #{tpu_custom_call.1} parent=0
    _
  %s9 = ssub.s32 1, %s7
  %s10 = scalar_select 0, %s9, %s7
  %11 = sst [smem:[#allocation5]] %s5
  loop: start=0, step=1, limit=4
  $region2: #{tpu_custom_call.1} parent=0 // loop_pre_header
    _
  $region3: #{tpu_custom_call.1} parent=0 // loop_header
    %s13 = sphi 0, %s17
    %p14 = scmp.ge.s32.totalorder %s13, 4
    %s20 = sphi 0, %s32
    %s21 = sphi 0, %s28
    %s22 = sphi 0, %s20
    %s23 = sphi 0, %s21
    %s24 = sphi 0, %s22
    %s25 = sphi 0, %s23
    %s35 = sphi 0, %s37
    %s38 = sphi 0, %s35
    %s39 = sphi 0, %s38
    %s55 = sphi 0, %s39
    %s59 = sphi 0, %s59
    %s61 = sphi 0, %s59
    %s62 = sphi 0, %s61
    %s76 = sphi 0, %s62
    %s80 = sphi 0, %s80
    %s82 = sphi 0, %s80
    %s83 = sphi 0, %s82
    %s97 = sphi 0, %s83
    %s101 = sphi 0, %s101
    %s103 = sphi 0, %s101
    %s104 = sphi 0, %s103
    %s118 = sphi 0, %s104
    %s122 = sphi 0, %s122
    %s124 = sphi 0, %s122
    %s125 = sphi 0, %s124
    %s139 = sphi 0, %s125
    %s143 = sphi 0, %s143
    %s145 = sphi 0, %s143
    %s146 = sphi 0, %s145
    %s160 = sphi 0, %s146
    %s168 = sphi 0, %s170
    %s171 = sphi 0, %s168
    %s172 = sphi 0, %s171
    %s188 = sphi 0, %s172
  $region4: #{tpu_custom_call.1} parent=0 // loop_header_branch
    %16 = sbr.rel (%p14) target = $region8
  $region5: #{tpu_custom_call.1} parent=0 // loop_body
    %s18 = ssub.s32 %s13, 1
    %s19 = ssub.s32 %s13, 2
    %s26 = sadd.s32 1, %s21
    %p27 = scmp.ge.s32.totalorder %s26, 1
    %s28 = scalar_select %p27, 0, %s26
    %s29 = sadd.s32 1, %s20
    %s30 = scalar_select %p27, %s29, %s20
    %p31 = scmp.ge.s32.totalorder %s30, 2
    %s32 = scalar_select %p31, 0, %s30
    %s33 = ssub.s32 %s20, %s32
    %p34 = scmp.eq.s32.totalorder %s33, 0
    %s36 = sadd.s32 %s35, 1
    %s37 = scalar_select %p34, %s35, %s36
    %p40 = pneg %p34
    %p41 = scmp.eq.s32.totalorder %s13, 1
    %p42 = por %p40, %p41
    %p43 = scmp.ne.s32.totalorder %s35, %s38
    %p44 = scmp.eq.s32.totalorder %s13, 0
    %p45 = por %p43, %p44
    %p46 = scmp.ne.s32.totalorder %s35, %s38
    %p47 = scmp.eq.s32.totalorder %s18, 1
    %p48 = por %p46, %p47
    %p49 = scmp.ne.s32.totalorder %s38, %s39
    %p50 = scmp.eq.s32.totalorder %s18, 0
    %p51 = por %p49, %p50
    %p52 = scmp.ne.s32.totalorder %s38, %s39
    %p53 = scmp.eq.s32.totalorder %s19, 1
    %p54 = por %p52, %p53
    %p56 = scmp.ne.s32.totalorder %s39, %s55
    %p57 = scmp.eq.s32.totalorder %s19, 0
    %p58 = por %p56, %p57
    %s60 = sadd.s32 %s59, 1
    %p63 = scmp.eq.s32.totalorder %s13, 1
    %p64 = scmp.ne.s32.totalorder %s59, %s61
    %p65 = scmp.eq.s32.totalorder %s13, 0
    %p66 = por %p64, %p65
    %p67 = scmp.ne.s32.totalorder %s59, %s61
    %p68 = scmp.eq.s32.totalorder %s18, 1
    %p69 = por %p67, %p68
    %p70 = scmp.ne.s32.totalorder %s61, %s62
    %p71 = scmp.eq.s32.totalorder %s18, 0
    %p72 = por %p70, %p71
    %p73 = scmp.ne.s32.totalorder %s61, %s62
    %p74 = scmp.eq.s32.totalorder %s19, 1
    %p75 = por %p73, %p74
    %p77 = scmp.ne.s32.totalorder %s62, %s76
    %p78 = scmp.eq.s32.totalorder %s19, 0
    %p79 = por %p77, %p78
    %s81 = sadd.s32 %s80, 1
    %p84 = scmp.eq.s32.totalorder %s13, 1
    %p85 = scmp.ne.s32.totalorder %s80, %s82
    %p86 = scmp.eq.s32.totalorder %s13, 0
    %p87 = por %p85, %p86
    %p88 = scmp.ne.s32.totalorder %s80, %s82
    %p89 = scmp.eq.s32.totalorder %s18, 1
    %p90 = por %p88, %p89
    %p91 = scmp.ne.s32.totalorder %s82, %s83
    %p92 = scmp.eq.s32.totalorder %s18, 0
    %p93 = por %p91, %p92
    %p94 = scmp.ne.s32.totalorder %s82, %s83
    %p95 = scmp.eq.s32.totalorder %s19, 1
    %p96 = por %p94, %p95
    %p98 = scmp.ne.s32.totalorder %s83, %s97
    %p99 = scmp.eq.s32.totalorder %s19, 0
    %p100 = por %p98, %p99
    %s102 = sadd.s32 %s101, 1
    %p105 = scmp.eq.s32.totalorder %s13, 1
    %p106 = scmp.ne.s32.totalorder %s101, %s103
    %p107 = scmp.eq.s32.totalorder %s13, 0
    %p108 = por %p106, %p107
    %p109 = scmp.ne.s32.totalorder %s101, %s103
    %p110 = scmp.eq.s32.totalorder %s18, 1
    %p111 = por %p109, %p110
    %p112 = scmp.ne.s32.totalorder %s103, %s104
    %p113 = scmp.eq.s32.totalorder %s18, 0
    %p114 = por %p112, %p113
    %p115 = scmp.ne.s32.totalorder %s103, %s104
    %p116 = scmp.eq.s32.totalorder %s19, 1
    %p117 = por %p115, %p116
    %p119 = scmp.ne.s32.totalorder %s104, %s118
    %p120 = scmp.eq.s32.totalorder %s19, 0
    %p121 = por %p119, %p120
    %s123 = sadd.s32 %s122, 1
    %p126 = scmp.eq.s32.totalorder %s13, 1
    %p127 = scmp.ne.s32.totalorder %s122, %s124
    %p128 = scmp.eq.s32.totalorder %s13, 0
    %p129 = por %p127, %p128
    %p130 = scmp.ne.s32.totalorder %s122, %s124
    %p131 = scmp.eq.s32.totalorder %s18, 1
    %p132 = por %p130, %p131
    %p133 = scmp.ne.s32.totalorder %s124, %s125
    %p134 = scmp.eq.s32.totalorder %s18, 0
    %p135 = por %p133, %p134
    %p136 = scmp.ne.s32.totalorder %s124, %s125
    %p137 = scmp.eq.s32.totalorder %s19, 1
    %p138 = por %p136, %p137
    %p140 = scmp.ne.s32.totalorder %s125, %s139
    %p141 = scmp.eq.s32.totalorder %s19, 0
    %p142 = por %p140, %p141
    %s144 = sadd.s32 %s143, 1
    %p147 = scmp.eq.s32.totalorder %s13, 1
    %p148 = scmp.ne.s32.totalorder %s143, %s145
    %p149 = scmp.eq.s32.totalorder %s13, 0
    %p150 = por %p148, %p149
    %p151 = scmp.ne.s32.totalorder %s143, %s145
    %p152 = scmp.eq.s32.totalorder %s18, 1
    %p153 = por %p151, %p152
    %p154 = scmp.ne.s32.totalorder %s145, %s146
    %p155 = scmp.eq.s32.totalorder %s18, 0
    %p156 = por %p154, %p155
    %p157 = scmp.ne.s32.totalorder %s145, %s146
    %p158 = scmp.eq.s32.totalorder %s19, 1
    %p159 = por %p157, %p158
    %p161 = scmp.ne.s32.totalorder %s146, %s160
    %p162 = scmp.eq.s32.totalorder %s19, 0
    %p163 = por %p161, %p162
    %s164 = ssub.s32 %s20, %s32
    %s165 = ssub.s32 %s21, %s28
    %s166 = sor.u32 %s164, %s165
    %p167 = scmp.eq.s32.totalorder %s166, 0
    %s169 = sadd.s32 %s168, 1
    %s170 = scalar_select %p167, %s168, %s169
    %p173 = pneg %p167
    %p174 = scmp.eq.s32.totalorder %s13, 1
    %p175 = por %p173, %p174
    %p176 = scmp.ne.s32.totalorder %s168, %s171
    %p177 = scmp.eq.s32.totalorder %s13, 0
    %p178 = por %p176, %p177
    %p179 = scmp.ne.s32.totalorder %s168, %s171
    %p180 = scmp.eq.s32.totalorder %s18, 1
    %p181 = por %p179, %p180
    %p182 = scmp.ne.s32.totalorder %s171, %s172
    %p183 = scmp.eq.s32.totalorder %s18, 0
    %p184 = por %p182, %p183
    %p185 = scmp.ne.s32.totalorder %s171, %s172
    %p186 = scmp.eq.s32.totalorder %s19, 1
    %p187 = por %p185, %p186
    %p189 = scmp.ne.s32.totalorder %s172, %s188
    %p190 = scmp.eq.s32.totalorder %s19, 0
    %p191 = por %p189, %p190
    %p192 = scmp.le.s32.totalorder 1, %s13
    %p193 = scmp.lt.s32.totalorder %s13, 3
    %p194 = pnand %p192, %p193
    %p195 = pneg %p194
    // Predicated region
    $region9: #{tpu_custom_call.1} parent=5 // pred_check
      _
    $region10: #{tpu_custom_call.1} parent=5 // pred_check_branch
      %197 = sbr.rel (%p194) target = $region12
    $region11: #{tpu_custom_call.1} parent=5 // pred_region
      %s198 = ssub.s32 %s13, 1
      // Predicated region
      $region13: #{tpu_custom_call.1} parent=11 // pred_check
        %p199 = pneg %p72
      $region14: #{tpu_custom_call.1} parent=11 // pred_check_branch
        %201 = sbr.rel (%p199) target = $region16
      $region15: #{tpu_custom_call.1} parent=11 // pred_region
        _
      $region16: #{tpu_custom_call.1} parent=11 // pred_fallthru
        _
      // Predicated region
      $region17: #{tpu_custom_call.1} parent=11 // pred_check
        %p202 = pneg %p93
      $region18: #{tpu_custom_call.1} parent=11 // pred_check_branch
        %204 = sbr.rel (%p202) target = $region20
      $region19: #{tpu_custom_call.1} parent=11 // pred_region
        _
      $region20: #{tpu_custom_call.1} parent=11 // pred_fallthru
        _
      // Predicated region
      $region21: #{tpu_custom_call.1} parent=11 // pred_check
        %p205 = pneg %p114
      $region22: #{tpu_custom_call.1} parent=11 // pred_check_branch
        %207 = sbr.rel (%p205) target = $region24
      $region23: #{tpu_custom_call.1} parent=11 // pred_region
        _
      $region24: #{tpu_custom_call.1} parent=11 // pred_fallthru
        _
      // Predicated region
      $region25: #{tpu_custom_call.1} parent=11 // pred_check
        %p208 = pneg %p135
      $region26: #{tpu_custom_call.1} parent=11 // pred_check_branch
        %210 = sbr.rel (%p208) target = $region28
      $region27: #{tpu_custom_call.1} parent=11 // pred_region
        _
      $region28: #{tpu_custom_call.1} parent=11 // pred_fallthru
        _
      // Predicated region
      $region29: #{tpu_custom_call.1} parent=11 // pred_check
        %p211 = pneg %p156
      $region30: #{tpu_custom_call.1} parent=11 // pred_check_branch
        %213 = sbr.rel (%p211) target = $region32
      $region31: #{tpu_custom_call.1} parent=11 // pred_region
        _
      $region32: #{tpu_custom_call.1} parent=11 // pred_fallthru
        _
    $region12: #{tpu_custom_call.1} parent=5 // pred_fallthru
      _
    %p214 = scmp.lt.s32.totalorder %s13, 2
    // Predicated region
    $region33: #{tpu_custom_call.1} parent=5 // pred_check
      %p215 = pneg %p214
    $region34: #{tpu_custom_call.1} parent=5 // pred_check_branch
      %217 = sbr.rel (%p215) target = $region36
    $region35: #{tpu_custom_call.1} parent=5 // pred_region
      // Predicated region
      $region37: #{tpu_custom_call.1} parent=35 // pred_check
        %p218 = pneg %p45
      $region38: #{tpu_custom_call.1} parent=35 // pred_check_branch
        %220 = sbr.rel (%p218) target = $region40
      $region39: #{tpu_custom_call.1} parent=35 // pred_region
        %p221 = scmp.lt.s32.totalorder %s20, 1
        %s222 = scalar_select %p221, %s20, 1
        %s223 = smul.addr %s222, 8
        %s224 = smul.addr %s223, 8
        %s225 = scalar_lea.vmem %s0, %s224
      $region40: #{tpu_custom_call.1} parent=35 // pred_fallthru
        _
    $region36: #{tpu_custom_call.1} parent=5 // pred_fallthru
      _
    %p226 = scmp.le.s32.totalorder 1, %s13
    %p227 = scmp.lt.s32.totalorder %s13, 3
    %p228 = pnand %p226, %p227
    %p229 = pneg %p228
    // Predicated region
    $region41: #{tpu_custom_call.1} parent=5 // pred_check
      _
    $region42: #{tpu_custom_call.1} parent=5 // pred_check_branch
      %231 = sbr.rel (%p228) target = $region44
    $region43: #{tpu_custom_call.1} parent=5 // pred_region
      %s232 = ssub.s32 %s13, 1
      %p233 = scmp.lt.s32.totalorder %s22, 1
      %s234 = scalar_select %p233, %s22, 1
      %s235 = smul.addr %s234, 8
      %s236 = smul.addr %s235, 8
      %s237 = scalar_lea.vmem %s0, %s236
      %p238 = pneg %p51
      %p239 = pneg %p48
      %p240 = pneg %p72
      %p241 = pneg %p69
      %p242 = pneg %p93
      %p243 = pneg %p90
      %p244 = pneg %p114
      %p245 = pneg %p111
      %p246 = pneg %p135
      %p247 = pneg %p132
      %p248 = pneg %p156
      %p249 = pneg %p153
      %p250 = pneg %p184
      %p251 = pneg %p181
      %s252 = smul.u32 8, %s23
      %p253 = scmp.lt.s32.totalorder %s22, 1
      %s254 = scalar_select %p253, %s22, 1
      %p255 = scmp.lt.s32.totalorder %s252, 7
      %s256 = scalar_select %p255, %s252, 7
      %s257 = smul.addr %s254, 8
      %s258 = sadd.s32 %s256, %s257
      %s259 = smul.addr %s258, 8
      %s260 = scalar_lea.vmem %s6, %s259
      %p261 = scmp.lt.s32.totalorder %s22, 1
      %s262 = scalar_select %p261, %s22, 1
      %s263 = smul.addr %s262, 8
      %s264 = smul.addr %s263, 8
      %s265 = scalar_lea.vmem %s0, %s264
      %s266 = smul.u32 8, %s23
      %p267 = scmp.lt.s32.totalorder %s22, 1
      %s268 = scalar_select %p267, %s22, 1
      %p269 = scmp.lt.s32.totalorder %s266, 7
      %s270 = scalar_select %p269, %s266, 7
      %s271 = smul.addr %s268, 8
      %s272 = sadd.s32 %s270, %s271
      %s273 = smul.addr %s272, 8
      %s274 = scalar_lea.vmem %s6, %s273
      %s275 = smul.u32 8, %s23
      %p277 = scmp.eq.s32.totalorder %s23, 0
      // Predicated region
      $region45: #{tpu_custom_call.1} parent=43 // pred_check
        %p278 = pneg %p277
      $region46: #{tpu_custom_call.1} parent=43 // pred_check_branch
        %280 = sbr.rel (%p278) target = $region48
      $region47: #{tpu_custom_call.1} parent=43 // pred_region
        %v281 = vld [vmem:[%s265] sm:$0xff]
        %v282 = vld [vmem:[%s265 + $0x8] sm:$0xff]
        %v283 = vld [vmem:[%s265 + $0x10] sm:$0xff]
        %v284 = vld [vmem:[%s265 + $0x18] sm:$0xff]
        %v285 = vld [vmem:[%s265 + $0x20] sm:$0xff]
        %v286 = vld [vmem:[%s265 + $0x28] sm:$0xff]
        %v287 = vld [vmem:[%s265 + $0x30] sm:$0xff]
        %v288 = vld [vmem:[%s265 + $0x38] sm:$0xff]
        %v289 = vpack.c.bf16 %v282, %v281
        %v290 = vpack.c.bf16 %v284, %v283
        %v291 = vpack.c.bf16 %v286, %v285
        %v292 = vpack.c.bf16 %v288, %v287
        %v293 = vld [vmem:[%s1] sm:$0xf]
        %v294 = vld [vmem:[%s1 + $0x4] sm:$0xf]
        %v295 = vld [vmem:[%s2] sm:$0x1]
        %v297 = vlaneseq
        %v298 = vshrl.u32 %v297, 7
        %v299 = vsub.s32 0, %v298
        %v300 = vrot.slane %v295, %v299
        %v304 = vunpack.c.l.b16 %v293
        %v305 = vunpack.c.l.b16 %v294
        %v306 = vpack.c.b16 %v305, %v304
        %vm308 = vcmask 130048
        %v310 = vsel %vm308, %v289, 0
        %v313 = vsel %vm308, %v290, 0
        %v316 = vsel %vm308, %v291, 0
        %v319 = vsel %vm308, %v292, 0
        %321 = vmatprep.subr.bf16.mxu0 0
        %322 = vmatpush1.bf16.msra.mxu0 0
        %323 = vmatprep.subr.bf16.mxu0 0
        %324 = vmatpush1.bf16.msra.mxu0 0
        %325 = vmatprep.subr.bf16.mxu0 0
        %326 = vmatpush1.bf16.msra.mxu0 0
        %327 = vmatprep.subr.bf16.mxu0 0
        %328 = vmatpush1.bf16.msra.mxu0 0
        %329 = vmatprep.subr.bf16.mxu0 0
        %330 = vmatpush1.bf16.msra.mxu0 0
        %331 = vmatprep.subr.bf16.mxu0 0
        %332 = vmatpush1.bf16.msra.mxu0 0
        %333 = vmatprep.subr.bf16.mxu0 0
        %334 = vmatpush1.bf16.msra.mxu0 0
        %335 = vmatprep.subr.bf16.mxu0 0
        %336 = vmatpush1.bf16.msra.mxu0 %v306
        %337 = vmatprep.subr.bf16.mxu0 0
        %338 = vmatpush2.bf16.msra.mxu0 0
        %339 = vmatprep.subr.bf16.mxu0 0
        %340 = vmatpush2.bf16.msra.mxu0 0
        %341 = vmatprep.subr.bf16.mxu0 0
        %342 = vmatpush2.bf16.msra.mxu0 0
        %343 = vmatprep.subr.bf16.mxu0 0
        %344 = vmatpush2.bf16.msra.mxu0 0
        %345 = vmatprep.subr.bf16.mxu0 0
        %346 = vmatpush2.bf16.msra.mxu0 0
        %347 = vmatprep.subr.bf16.mxu0 0
        %348 = vmatpush2.bf16.msra.mxu0 0
        %349 = vmatprep.subr.bf16.mxu0 0
        %350 = vmatpush2.bf16.msra.mxu0 0
        %351 = vmatprep.subr.bf16.mxu0 0
        %352 = vmatpush2.bf16.msra.mxu0 0
        %353 = vmatprep.mubr.bf16.mxu0 0
        %354 = vmatmul.mubr.bf16.gmra.mxu0 %v310
        %v355 = vpop.f32.mrf.mxu0
        %v356 = vadd.f32 %v300, %v355
        %v357 = vpop.f32.mrf.mxu0
        %v358 = vpop.f32.mrf.mxu0
        %v359 = vadd.f32 %v300, %v358
        %v360 = vpop.f32.mrf.mxu0
        %361 = vmatprep.mubr.bf16.mxu0 0
        %362 = vmatmul.mubr.bf16.gmra.mxu0 %v313
        %v363 = vpop.f32.mrf.mxu0
        %v364 = vadd.f32 %v300, %v363
        %v365 = vpop.f32.mrf.mxu0
        %v366 = vpop.f32.mrf.mxu0
        %v367 = vadd.f32 %v300, %v366
        %v368 = vpop.f32.mrf.mxu0
        %369 = vmatprep.mubr.bf16.mxu0 0
        %370 = vmatmul.mubr.bf16.gmra.mxu0 %v316
        %v371 = vpop.f32.mrf.mxu0
        %v372 = vadd.f32 %v300, %v371
        %v373 = vpop.f32.mrf.mxu0
        %v374 = vpop.f32.mrf.mxu0
        %v375 = vadd.f32 %v300, %v374
        %v376 = vpop.f32.mrf.mxu0
        %377 = vmatprep.mubr.bf16.mxu0 0
        %378 = vmatmul.mubr.bf16.gmra.mxu0 %v319
        %v379 = vpop.f32.mrf.mxu0
        %v380 = vadd.f32 %v300, %v379
        %v381 = vpop.f32.mrf.mxu0
        %v382 = vpop.f32.mrf.mxu0
        %v383 = vadd.f32 %v300, %v382
        %v384 = vpop.f32.mrf.mxu0
        %385 = vdwg.mxu0
        %v386 = vpack.c.bf16 %v359, %v356
        %v387 = vpack.c.bf16 %v367, %v364
        %v388 = vpack.c.bf16 %v375, %v372
        %v389 = vpack.c.bf16 %v383, %v380
        %v394 = vunpack.c.l.b16 %v386
        %v395 = vunpack.c.h.b16 %v386
        %v396 = vunpack.c.l.b16 %v387
        %v397 = vunpack.c.h.b16 %v387
        %v398 = vunpack.c.l.b16 %v388
        %v399 = vunpack.c.h.b16 %v388
        %v400 = vunpack.c.l.b16 %v389
        %v401 = vunpack.c.h.b16 %v389
        %v402 = vpack.c.b16 %v394, %v394
        %v403 = vpack.c.b16 %v395, %v395
        %v404 = vpack.c.b16 %v396, %v396
        %v405 = vpack.c.b16 %v397, %v397
        %v406 = vpack.c.b16 %v398, %v398
        %v407 = vpack.c.b16 %v399, %v399
        %v408 = vpack.c.b16 %v400, %v400
        %v409 = vpack.c.b16 %v401, %v401
        %vm418 = vcmask 11264
        %419 = vst.msk [vmem:[#allocation2] sm:$0xf] %vm418, %v402
        %420 = vst.msk [vmem:[#allocation2 + $0x4] sm:$0xf] %vm418, %v403
        %421 = vst.msk [vmem:[#allocation2 + $0x8] sm:$0xf] %vm418, %v404
        %422 = vst.msk [vmem:[#allocation2 + $0xc] sm:$0xf] %vm418, %v405
        %423 = vst.msk [vmem:[#allocation2 + $0x10] sm:$0xf] %vm418, %v406
        %424 = vst.msk [vmem:[#allocation2 + $0x14] sm:$0xf] %vm418, %v407
        %425 = vst.msk [vmem:[#allocation2 + $0x18] sm:$0xf] %vm418, %v408
        %426 = vst.msk [vmem:[#allocation2 + $0x1c] sm:$0xf] %vm418, %v409
        %427 = vrot.lane.b32.xlu0 %v402, 126
        %v428 = vpop.permute.xlu0 %427
        %429 = vrot.lane.b32.xlu0 %v403, 126
        %v430 = vpop.permute.xlu0 %429
        %431 = vrot.lane.b32.xlu0 %v404, 126
        %v432 = vpop.permute.xlu0 %431
        %433 = vrot.lane.b32.xlu0 %v405, 126
        %v434 = vpop.permute.xlu0 %433
        %435 = vrot.lane.b32.xlu0 %v406, 126
        %v436 = vpop.permute.xlu0 %435
        %437 = vrot.lane.b32.xlu0 %v407, 126
        %v438 = vpop.permute.xlu0 %437
        %439 = vrot.lane.b32.xlu0 %v408, 126
        %v440 = vpop.permute.xlu0 %439
        %441 = vrot.lane.b32.xlu0 %v409, 126
        %v442 = vpop.permute.xlu0 %441
        %451 = vst.msk [vmem:[#allocation3] sm:$0xf] %vm418, %v428
        %452 = vst.msk [vmem:[#allocation3 + $0x4] sm:$0xf] %vm418, %v430
        %453 = vst.msk [vmem:[#allocation3 + $0x8] sm:$0xf] %vm418, %v432
        %454 = vst.msk [vmem:[#allocation3 + $0xc] sm:$0xf] %vm418, %v434
        %455 = vst.msk [vmem:[#allocation3 + $0x10] sm:$0xf] %vm418, %v436
        %456 = vst.msk [vmem:[#allocation3 + $0x14] sm:$0xf] %vm418, %v438
        %457 = vst.msk [vmem:[#allocation3 + $0x18] sm:$0xf] %vm418, %v440
        %458 = vst.msk [vmem:[#allocation3 + $0x1c] sm:$0xf] %vm418, %v442
        %v459 = vld [vmem:[%s3] sm:$0xf]
        %v460 = vld [vmem:[%s3 + $0x4] sm:$0xf]
        %v461 = vld [vmem:[%s4] sm:$0x1]
        %v463 = vlaneseq
        %v464 = vshrl.u32 %v463, 7
        %v465 = vsub.s32 0, %v464
        %v466 = vrot.slane %v461, %v465
        %v470 = vunpack.c.l.b16 %v459
        %v471 = vunpack.c.l.b16 %v460
        %v472 = vpack.c.b16 %v471, %v470
        %474 = vmatprep.subr.bf16.mxu0 0
        %475 = vmatpush1.bf16.msra.mxu0 0
        %476 = vmatprep.subr.bf16.mxu0 0
        %477 = vmatpush1.bf16.msra.mxu0 0
        %478 = vmatprep.subr.bf16.mxu0 0
        %479 = vmatpush1.bf16.msra.mxu0 0
        %480 = vmatprep.subr.bf16.mxu0 0
        %481 = vmatpush1.bf16.msra.mxu0 0
        %482 = vmatprep.subr.bf16.mxu0 0
        %483 = vmatpush1.bf16.msra.mxu0 0
        %484 = vmatprep.subr.bf16.mxu0 0
        %485 = vmatpush1.bf16.msra.mxu0 0
        %486 = vmatprep.subr.bf16.mxu0 0
        %487 = vmatpush1.bf16.msra.mxu0 0
        %488 = vmatprep.subr.bf16.mxu0 0
        %489 = vmatpush1.bf16.msra.mxu0 %v472
        %490 = vmatprep.subr.bf16.mxu0 0
        %491 = vmatpush2.bf16.msra.mxu0 0
        %492 = vmatprep.subr.bf16.mxu0 0
        %493 = vmatpush2.bf16.msra.mxu0 0
        %494 = vmatprep.subr.bf16.mxu0 0
        %495 = vmatpush2.bf16.msra.mxu0 0
        %496 = vmatprep.subr.bf16.mxu0 0
        %497 = vmatpush2.bf16.msra.mxu0 0
        %498 = vmatprep.subr.bf16.mxu0 0
        %499 = vmatpush2.bf16.msra.mxu0 0
        %500 = vmatprep.subr.bf16.mxu0 0
        %501 = vmatpush2.bf16.msra.mxu0 0
        %502 = vmatprep.subr.bf16.mxu0 0
        %503 = vmatpush2.bf16.msra.mxu0 0
        %504 = vmatprep.subr.bf16.mxu0 0
        %505 = vmatpush2.bf16.msra.mxu0 0
        %506 = vmatprep.mubr.bf16.mxu0 0
        %507 = vmatmul.mubr.bf16.gmra.mxu0 %v310
        %v508 = vpop.f32.mrf.mxu0
        %v509 = vadd.f32 %v466, %v508
        %v510 = vpop.f32.mrf.mxu0
        %v511 = vpop.f32.mrf.mxu0
        %v512 = vadd.f32 %v466, %v511
        %v513 = vpop.f32.mrf.mxu0
        %514 = vmatprep.mubr.bf16.mxu0 0
        %515 = vmatmul.mubr.bf16.gmra.mxu0 %v313
        %v516 = vpop.f32.mrf.mxu0
        %v517 = vadd.f32 %v466, %v516
        %v518 = vpop.f32.mrf.mxu0
        %v519 = vpop.f32.mrf.mxu0
        %v520 = vadd.f32 %v466, %v519
        %v521 = vpop.f32.mrf.mxu0
        %522 = vmatprep.mubr.bf16.mxu0 0
        %523 = vmatmul.mubr.bf16.gmra.mxu0 %v316
        %v524 = vpop.f32.mrf.mxu0
        %v525 = vadd.f32 %v466, %v524
        %v526 = vpop.f32.mrf.mxu0
        %v527 = vpop.f32.mrf.mxu0
        %v528 = vadd.f32 %v466, %v527
        %v529 = vpop.f32.mrf.mxu0
        %530 = vmatprep.mubr.bf16.mxu0 0
        %531 = vmatmul.mubr.bf16.gmra.mxu0 %v319
        %v532 = vpop.f32.mrf.mxu0
        %v533 = vadd.f32 %v466, %v532
        %v534 = vpop.f32.mrf.mxu0
        %v535 = vpop.f32.mrf.mxu0
        %v536 = vadd.f32 %v466, %v535
        %v537 = vpop.f32.mrf.mxu0
        %538 = vdwg.mxu0
        %v539 = vpack.c.bf16 %v512, %v509
        %v540 = vpack.c.bf16 %v520, %v517
        %v541 = vpack.c.bf16 %v528, %v525
        %v542 = vpack.c.bf16 %v536, %v533
        %v547 = vunpack.c.l.b16 %v539
        %v548 = vunpack.c.h.b16 %v539
        %v549 = vunpack.c.l.b16 %v540
        %v550 = vunpack.c.h.b16 %v540
        %v551 = vunpack.c.l.b16 %v541
        %v552 = vunpack.c.h.b16 %v541
        %v553 = vunpack.c.l.b16 %v542
        %v554 = vunpack.c.h.b16 %v542
        %v555 = vpack.c.b16 %v547, %v547
        %v556 = vpack.c.b16 %v548, %v548
        %v557 = vpack.c.b16 %v549, %v549
        %v558 = vpack.c.b16 %v550, %v550
        %v559 = vpack.c.b16 %v551, %v551
        %v560 = vpack.c.b16 %v552, %v552
        %v561 = vpack.c.b16 %v553, %v553
        %v562 = vpack.c.b16 %v554, %v554
        %vm571 = vcmask 125952
        %572 = vst.msk [vmem:[#allocation4] sm:$0xf] %vm571, %v555
        %573 = vst.msk [vmem:[#allocation4 + $0x4] sm:$0xf] %vm571, %v556
        %574 = vst.msk [vmem:[#allocation4 + $0x8] sm:$0xf] %vm571, %v557
        %575 = vst.msk [vmem:[#allocation4 + $0xc] sm:$0xf] %vm571, %v558
        %576 = vst.msk [vmem:[#allocation4 + $0x10] sm:$0xf] %vm571, %v559
        %577 = vst.msk [vmem:[#allocation4 + $0x14] sm:$0xf] %vm571, %v560
        %578 = vst.msk [vmem:[#allocation4 + $0x18] sm:$0xf] %vm571, %v561
        %579 = vst.msk [vmem:[#allocation4 + $0x1c] sm:$0xf] %vm571, %v562
      $region48: #{tpu_custom_call.1} parent=43 // pred_fallthru
        _
      %s580 = smul.u32 %s23, 64
      %s581 = sshra.s32 %s580, 3
      %s582 = sand.u32 %s580, 7
      %s583 = smul.addr %s581, 4
      %s584 = scalar_lea.vmem [#allocation2], %s583
      %v585 = vld [vmem:[%s584] sm:$0xf]
      %v586 = vld [vmem:[%s584 + $0x4] sm:$0xf]
      %v587 = vld [vmem:[%s584 + $0x8] sm:$0xf]
      %v588 = vld [vmem:[%s584 + $0xc] sm:$0xf]
      %v589 = vld [vmem:[%s584 + $0x10] sm:$0xf]
      %v590 = vld [vmem:[%s584 + $0x14] sm:$0xf]
      %v591 = vld [vmem:[%s584 + $0x18] sm:$0xf]
      %v592 = vld [vmem:[%s584 + $0x1c] sm:$0xf]
      %v593 = vld [vmem:[#allocation3] sm:$0xf]
      %v594 = vld [vmem:[#allocation3 + $0x4] sm:$0xf]
      %v595 = vld [vmem:[#allocation3 + $0x8] sm:$0xf]
      %v596 = vld [vmem:[#allocation3 + $0xc] sm:$0xf]
      %v597 = vld [vmem:[#allocation3 + $0x10] sm:$0xf]
      %v598 = vld [vmem:[#allocation3 + $0x14] sm:$0xf]
      %v599 = vld [vmem:[#allocation3 + $0x18] sm:$0xf]
      %v600 = vld [vmem:[#allocation3 + $0x1c] sm:$0xf]
      %v609 = vunpack.c.l.b16 %v585
      %v610 = vunpack.c.l.b16 %v586
      %v611 = vunpack.c.l.b16 %v587
      %v612 = vunpack.c.l.b16 %v588
      %v613 = vunpack.c.l.b16 %v589
      %v614 = vunpack.c.l.b16 %v590
      %v615 = vunpack.c.l.b16 %v591
      %v616 = vunpack.c.l.b16 %v592
      %v617 = vpack.c.b16 %v610, %v609
      %v618 = vpack.c.b16 %v612, %v611
      %v619 = vpack.c.b16 %v614, %v613
      %v620 = vpack.c.b16 %v616, %v615
      %v629 = vunpack.c.l.b16 %v593
      %v630 = vunpack.c.l.b16 %v594
      %v631 = vunpack.c.l.b16 %v595
      %v632 = vunpack.c.l.b16 %v596
      %v633 = vunpack.c.l.b16 %v597
      %v634 = vunpack.c.l.b16 %v598
      %v635 = vunpack.c.l.b16 %v599
      %v636 = vunpack.c.l.b16 %v600
      %v637 = vpack.c.b16 %v630, %v629
      %v638 = vpack.c.b16 %v632, %v631
      %v639 = vpack.c.b16 %v634, %v633
      %v640 = vpack.c.b16 %v636, %v635
      %vm641 = vcmask 15360
      %v643 = vsel %vm641, %v617, 0
      %v646 = vsel %vm641, %v618, 0
      %v649 = vsel %vm641, %v619, 0
      %v652 = vsel %vm641, %v620, 0
      %v655 = vsel %vm641, %v637, 0
      %v658 = vsel %vm641, %v638, 0
      %v661 = vsel %vm641, %v639, 0
      %v664 = vsel %vm641, %v640, 0
      %666 = vmatprep.subr.bf16.mxu0 0
      %667 = vmatpush1.bf16.xpose.msra.mxu0 0
      %668 = vmatprep.subr.bf16.mxu0 0
      %669 = vmatpush1.bf16.xpose.msra.mxu0 0
      %670 = vmatprep.subr.bf16.mxu0 0
      %671 = vmatpush1.bf16.xpose.msra.mxu0 0
      %672 = vmatprep.subr.bf16.mxu0 0
      %673 = vmatpush1.bf16.xpose.msra.mxu0 0
      %674 = vmatprep.subr.bf16.mxu0 0
      %675 = vmatpush1.bf16.xpose.msra.mxu0 %v664
      %676 = vmatprep.subr.bf16.mxu0 0
      %677 = vmatpush1.bf16.xpose.msra.mxu0 %v661
      %678 = vmatprep.subr.bf16.mxu0 0
      %679 = vmatpush1.bf16.xpose.msra.mxu0 %v658
      %680 = vmatprep.subr.bf16.mxu0 0
      %681 = vmatpush1.bf16.xpose.msra.mxu0 %v655
      %682 = vmatprep.subr.bf16.mxu0 0
      %683 = vmatpush2.bf16.xpose.msra.mxu0 0
      %684 = vmatprep.subr.bf16.mxu0 0
      %685 = vmatpush2.bf16.xpose.msra.mxu0 0
      %686 = vmatprep.subr.bf16.mxu0 0
      %687 = vmatpush2.bf16.xpose.msra.mxu0 0
      %688 = vmatprep.subr.bf16.mxu0 0
      %689 = vmatpush2.bf16.xpose.msra.mxu0 0
      %690 = vmatprep.subr.bf16.mxu0 0
      %691 = vmatpush2.bf16.xpose.msra.mxu0 0
      %692 = vmatprep.subr.bf16.mxu0 0
      %693 = vmatpush2.bf16.xpose.msra.mxu0 0
      %694 = vmatprep.subr.bf16.mxu0 0
      %695 = vmatpush2.bf16.xpose.msra.mxu0 0
      %696 = vmatprep.subr.bf16.mxu0 0
      %697 = vmatpush2.bf16.xpose.msra.mxu0 0
      %698 = vmatprep.mubr.bf16.mxu0 0
      %699 = vmatmul.mubr.bf16.gmra.mxu0 %v643
      %v700 = vpop.f32.mrf.mxu0
      %v701 = vadd.f32 0.0, %v700
      %v702 = vpop.f32.mrf.mxu0
      %v703 = vpop.f32.mrf.mxu0
      %v704 = vadd.f32 0.0, %v703
      %v705 = vpop.f32.mrf.mxu0
      %706 = vmatprep.mubr.bf16.mxu0 0
      %707 = vmatmul.mubr.bf16.gmra.mxu0 %v646
      %v708 = vpop.f32.mrf.mxu0
      %v709 = vadd.f32 0.0, %v708
      %v710 = vpop.f32.mrf.mxu0
      %v711 = vpop.f32.mrf.mxu0
      %v712 = vadd.f32 0.0, %v711
      %v713 = vpop.f32.mrf.mxu0
      %714 = vmatprep.mubr.bf16.mxu0 0
      %715 = vmatmul.mubr.bf16.gmra.mxu0 %v649
      %v716 = vpop.f32.mrf.mxu0
      %v717 = vadd.f32 0.0, %v716
      %v718 = vpop.f32.mrf.mxu0
      %v719 = vpop.f32.mrf.mxu0
      %v720 = vadd.f32 0.0, %v719
      %v721 = vpop.f32.mrf.mxu0
      %722 = vmatprep.mubr.bf16.mxu0 0
      %723 = vmatmul.mubr.bf16.gmra.mxu0 %v652
      %v724 = vpop.f32.mrf.mxu0
      %v725 = vadd.f32 0.0, %v724
      %v726 = vpop.f32.mrf.mxu0
      %v727 = vpop.f32.mrf.mxu0
      %v728 = vadd.f32 0.0, %v727
      %v729 = vpop.f32.mrf.mxu0
      %730 = vdwg.mxu0
      %vm731 = vcmask 523264
      %v732 = vsel %vm731, %v701, -inf
      %733 = vmax.xlane.f32.xlu0 %v732
      %v734 = vpop.xlane.xlu0 %733
      %v735 = vsel %vm731, %v704, -inf
      %736 = vmax.xlane.f32.xlu0 %v735
      %v737 = vpop.xlane.xlu0 %736
      %v738 = vsel %vm731, %v709, -inf
      %739 = vmax.xlane.f32.xlu0 %v738
      %v740 = vpop.xlane.xlu0 %739
      %v741 = vsel %vm731, %v712, -inf
      %742 = vmax.xlane.f32.xlu0 %v741
      %v743 = vpop.xlane.xlu0 %742
      %v744 = vsel %vm731, %v717, -inf
      %745 = vmax.xlane.f32.xlu0 %v744
      %v746 = vpop.xlane.xlu0 %745
      %v747 = vsel %vm731, %v720, -inf
      %748 = vmax.xlane.f32.xlu0 %v747
      %v749 = vpop.xlane.xlu0 %748
      %v750 = vsel %vm731, %v725, -inf
      %751 = vmax.xlane.f32.xlu0 %v750
      %v752 = vpop.xlane.xlu0 %751
      %v753 = vsel %vm731, %v728, -inf
      %754 = vmax.xlane.f32.xlu0 %v753
      %v755 = vpop.xlane.xlu0 %754
      %v756 = vsub.f32 %v701, %v734
      %v757 = vsub.f32 %v704, %v737
      %v758 = vsub.f32 %v709, %v740
      %v759 = vsub.f32 %v712, %v743
      %v760 = vsub.f32 %v717, %v746
      %v761 = vsub.f32 %v720, %v749
      %v762 = vsub.f32 %v725, %v752
      %v763 = vsub.f32 %v728, %v755
      %v764 = vmul.f32 %v756, 1.442695
      %v765 = vpow.pop %v764
      %v766 = vmul.f32 %v757, 1.442695
      %v767 = vpow.pop %v766
      %v768 = vmul.f32 %v758, 1.442695
      %v769 = vpow.pop %v768
      %v770 = vmul.f32 %v759, 1.442695
      %v771 = vpow.pop %v770
      %v772 = vmul.f32 %v760, 1.442695
      %v773 = vpow.pop %v772
      %v774 = vmul.f32 %v761, 1.442695
      %v775 = vpow.pop %v774
      %v776 = vmul.f32 %v762, 1.442695
      %v777 = vpow.pop %v776
      %v778 = vmul.f32 %v763, 1.442695
      %v779 = vpow.pop %v778
      %v780 = vsel %vm731, %v765, 0.0
      %781 = vadd.xlane.f32.xlu0 %v780
      %v782 = vpop.xlane.xlu0 %781
      %v783 = vsel %vm731, %v767, 0.0
      %784 = vadd.xlane.f32.xlu0 %v783
      %v785 = vpop.xlane.xlu0 %784
      %v786 = vsel %vm731, %v769, 0.0
      %787 = vadd.xlane.f32.xlu0 %v786
      %v788 = vpop.xlane.xlu0 %787
      %v789 = vsel %vm731, %v771, 0.0
      %790 = vadd.xlane.f32.xlu0 %v789
      %v791 = vpop.xlane.xlu0 %790
      %v792 = vsel %vm731, %v773, 0.0
      %793 = vadd.xlane.f32.xlu0 %v792
      %v794 = vpop.xlane.xlu0 %793
      %v795 = vsel %vm731, %v775, 0.0
      %796 = vadd.xlane.f32.xlu0 %v795
      %v797 = vpop.xlane.xlu0 %796
      %v798 = vsel %vm731, %v777, 0.0
      %799 = vadd.xlane.f32.xlu0 %v798
      %v800 = vpop.xlane.xlu0 %799
      %v801 = vsel %vm731, %v779, 0.0
      %802 = vadd.xlane.f32.xlu0 %v801
      %v803 = vpop.xlane.xlu0 %802
      %v804 = vpack.c.bf16 %v767, %v765
      %v805 = vpack.c.bf16 %v771, %v769
      %v806 = vpack.c.bf16 %v775, %v773
      %v807 = vpack.c.bf16 %v779, %v777
      %v808 = vld [vmem:[#allocation4] sm:$0xf]
      %v809 = vld [vmem:[#allocation4 + $0x4] sm:$0xf]
      %v810 = vld [vmem:[#allocation4 + $0x8] sm:$0xf]
      %v811 = vld [vmem:[#allocation4 + $0xc] sm:$0xf]
      %v812 = vld [vmem:[#allocation4 + $0x10] sm:$0xf]
      %v813 = vld [vmem:[#allocation4 + $0x14] sm:$0xf]
      %v814 = vld [vmem:[#allocation4 + $0x18] sm:$0xf]
      %v815 = vld [vmem:[#allocation4 + $0x1c] sm:$0xf]
      %v824 = vunpack.c.l.b16 %v808
      %v825 = vunpack.c.l.b16 %v809
      %v826 = vunpack.c.l.b16 %v810
      %v827 = vunpack.c.l.b16 %v811
      %v828 = vunpack.c.l.b16 %v812
      %v829 = vunpack.c.l.b16 %v813
      %v830 = vunpack.c.l.b16 %v814
      %v831 = vunpack.c.l.b16 %v815
      %v832 = vpack.c.b16 %v825, %v824
      %v833 = vpack.c.b16 %v827, %v826
      %v834 = vpack.c.b16 %v829, %v828
      %v835 = vpack.c.b16 %v831, %v830
      %v841 = vsel %vm731, %v804, 0
      %v844 = vsel %vm731, %v805, 0
      %v847 = vsel %vm731, %v806, 0
      %v850 = vsel %vm731, %v807, 0
      %852 = vmatprep.subr.bf16.mxu0 0
      %853 = vmatpush1.bf16.msra.mxu0 0
      %854 = vmatprep.subr.bf16.mxu0 0
      %855 = vmatpush1.bf16.msra.mxu0 0
      %856 = vmatprep.subr.bf16.mxu0 0
      %857 = vmatpush1.bf16.msra.mxu0 0
      %858 = vmatprep.subr.bf16.mxu0 0
      %859 = vmatpush1.bf16.msra.mxu0 0
      %860 = vmatprep.subr.bf16.mxu0 0
      %861 = vmatpush1.bf16.msra.mxu0 %v835
      %862 = vmatprep.subr.bf16.mxu0 0
      %863 = vmatpush1.bf16.msra.mxu0 %v834
      %864 = vmatprep.subr.bf16.mxu0 0
      %865 = vmatpush1.bf16.msra.mxu0 %v833
      %866 = vmatprep.subr.bf16.mxu0 0
      %867 = vmatpush1.bf16.msra.mxu0 %v832
      %868 = vmatprep.subr.bf16.mxu0 0
      %869 = vmatpush2.bf16.msra.mxu0 0
      %870 = vmatprep.subr.bf16.mxu0 0
      %871 = vmatpush2.bf16.msra.mxu0 0
      %872 = vmatprep.subr.bf16.mxu0 0
      %873 = vmatpush2.bf16.msra.mxu0 0
      %874 = vmatprep.subr.bf16.mxu0 0
      %875 = vmatpush2.bf16.msra.mxu0 0
      %876 = vmatprep.subr.bf16.mxu0 0
      %877 = vmatpush2.bf16.msra.mxu0 0
      %878 = vmatprep.subr.bf16.mxu0 0
      %879 = vmatpush2.bf16.msra.mxu0 0
      %880 = vmatprep.subr.bf16.mxu0 0
      %881 = vmatpush2.bf16.msra.mxu0 0
      %882 = vmatprep.subr.bf16.mxu0 0
      %883 = vmatpush2.bf16.msra.mxu0 0
      %884 = vmatprep.mubr.bf16.mxu0 0
      %885 = vmatmul.mubr.bf16.gmra.mxu0 %v841
      %v886 = vpop.f32.mrf.mxu0
      %v887 = vadd.f32 0.0, %v886
      %v888 = vpop.f32.mrf.mxu0
      %v889 = vpop.f32.mrf.mxu0
      %v890 = vadd.f32 0.0, %v889
      %v891 = vpop.f32.mrf.mxu0
      %892 = vmatprep.mubr.bf16.mxu0 0
      %893 = vmatmul.mubr.bf16.gmra.mxu0 %v844
      %v894 = vpop.f32.mrf.mxu0
      %v895 = vadd.f32 0.0, %v894
      %v896 = vpop.f32.mrf.mxu0
      %v897 = vpop.f32.mrf.mxu0
      %v898 = vadd.f32 0.0, %v897
      %v899 = vpop.f32.mrf.mxu0
      %900 = vmatprep.mubr.bf16.mxu0 0
      %901 = vmatmul.mubr.bf16.gmra.mxu0 %v847
      %v902 = vpop.f32.mrf.mxu0
      %v903 = vadd.f32 0.0, %v902
      %v904 = vpop.f32.mrf.mxu0
      %v905 = vpop.f32.mrf.mxu0
      %v906 = vadd.f32 0.0, %v905
      %v907 = vpop.f32.mrf.mxu0
      %908 = vmatprep.mubr.bf16.mxu0 0
      %909 = vmatmul.mubr.bf16.gmra.mxu0 %v850
      %v910 = vpop.f32.mrf.mxu0
      %v911 = vadd.f32 0.0, %v910
      %v912 = vpop.f32.mrf.mxu0
      %v913 = vpop.f32.mrf.mxu0
      %v914 = vadd.f32 0.0, %v913
      %v915 = vpop.f32.mrf.mxu0
      %916 = vdwg.mxu0
      %s917 = sld [smem:[#allocation5]]
      %v918 = vrcp.pop %v782
      %v919 = vrcp.pop %v785
      %v920 = vrcp.pop %v788
      %v921 = vrcp.pop %v791
      %v922 = vrcp.pop %v794
      %v923 = vrcp.pop %v797
      %v924 = vrcp.pop %v800
      %v925 = vrcp.pop %v803
      %v926 = vstv %s917
      %v927 = vmul.f32 %v926, %v918
      %v928 = vmul.f32 %v926, %v919
      %v929 = vmul.f32 %v926, %v920
      %v930 = vmul.f32 %v926, %v921
      %v931 = vmul.f32 %v926, %v922
      %v932 = vmul.f32 %v926, %v923
      %v933 = vmul.f32 %v926, %v924
      %v934 = vmul.f32 %v926, %v925
      %s935 = scalar_lea.vmem %s265, %s580
      %v936 = vld [vmem:[%s935] sm:$0xff]
      %v937 = vld [vmem:[%s935 + $0x8] sm:$0xff]
      %v938 = vld [vmem:[%s935 + $0x10] sm:$0xff]
      %v939 = vld [vmem:[%s935 + $0x18] sm:$0xff]
      %v940 = vld [vmem:[%s935 + $0x20] sm:$0xff]
      %v941 = vld [vmem:[%s935 + $0x28] sm:$0xff]
      %v942 = vld [vmem:[%s935 + $0x30] sm:$0xff]
      %v943 = vld [vmem:[%s935 + $0x38] sm:$0xff]
      %v944 = vmul.f32 %v887, %v927
      %v945 = vmul.f32 %v890, %v928
      %v946 = vmul.f32 %v895, %v929
      %v947 = vmul.f32 %v898, %v930
      %v948 = vmul.f32 %v903, %v931
      %v949 = vmul.f32 %v906, %v932
      %v950 = vmul.f32 %v911, %v933
      %v951 = vmul.f32 %v914, %v934
      %v952 = vadd.f32 %v944, %v936
      %v953 = vadd.f32 %v945, %v937
      %v954 = vadd.f32 %v946, %v938
      %v955 = vadd.f32 %v947, %v939
      %v956 = vadd.f32 %v948, %v940
      %v957 = vadd.f32 %v949, %v941
      %v958 = vadd.f32 %v950, %v942
      %v959 = vadd.f32 %v951, %v943
      %vm960 = vcmask 130048
      %961 = vst.msk [vmem:[%s274] sm:$0xff] %vm960, %v952
      %962 = vst.msk [vmem:[%s274 + $0x8] sm:$0xff] %vm960, %v953
      %963 = vst.msk [vmem:[%s274 + $0x10] sm:$0xff] %vm960, %v954
      %964 = vst.msk [vmem:[%s274 + $0x18] sm:$0xff] %vm960, %v955
      %965 = vst.msk [vmem:[%s274 + $0x20] sm:$0xff] %vm960, %v956
      %966 = vst.msk [vmem:[%s274 + $0x28] sm:$0xff] %vm960, %v957
      %967 = vst.msk [vmem:[%s274 + $0x30] sm:$0xff] %vm960, %v958
      %968 = vst.msk [vmem:[%s274 + $0x38] sm:$0xff] %vm960, %v959
      %s969 = smul.u32 8, %s23
      %p970 = scmp.lt.s32.totalorder %s22, 1
      %s971 = scalar_select %p970, %s22, 1
      %p972 = scmp.lt.s32.totalorder %s969, 7
      %s973 = scalar_select %p972, %s969, 7
      %s974 = smul.addr %s971, 8
      %s975 = sadd.s32 %s973, %s974
      %s976 = smul.addr %s975, 8
      %s977 = scalar_lea.vmem %s6, %s976
      // Predicated region
      $region49: #{tpu_custom_call.1} parent=43 // pred_check
        %p978 = pneg %p181
      $region50: #{tpu_custom_call.1} parent=43 // pred_check_branch
        %980 = sbr.rel (%p978) target = $region52
      $region51: #{tpu_custom_call.1} parent=43 // pred_region
        %s981 = smul.u32 8, %s23
      $region52: #{tpu_custom_call.1} parent=43 // pred_fallthru
        _
    $region44: #{tpu_custom_call.1} parent=5 // pred_fallthru
      _
    %p982 = scmp.le.s32.totalorder 2, %s13
    // Predicated region
    $region53: #{tpu_custom_call.1} parent=5 // pred_check
      %p983 = pneg %p982
    $region54: #{tpu_custom_call.1} parent=5 // pred_check_branch
      %985 = sbr.rel (%p983) target = $region56
    $region55: #{tpu_custom_call.1} parent=5 // pred_region
      %s986 = ssub.s32 %s13, 2
      // Predicated region
      $region57: #{tpu_custom_call.1} parent=55 // pred_check
        %p987 = pneg %p187
      $region58: #{tpu_custom_call.1} parent=55 // pred_check_branch
        %989 = sbr.rel (%p987) target = $region60
      $region59: #{tpu_custom_call.1} parent=55 // pred_region
        %s990 = smul.u32 8, %s25
        %p991 = scmp.lt.s32.totalorder %s24, 1
        %s992 = scalar_select %p991, %s24, 1
        %p993 = scmp.lt.s32.totalorder %s990, 7
        %s994 = scalar_select %p993, %s990, 7
        %s995 = smul.addr %s992, 8
        %s996 = sadd.s32 %s994, %s995
        %s997 = smul.addr %s996, 8
        %s998 = scalar_lea.vmem %s6, %s997
      $region60: #{tpu_custom_call.1} parent=55 // pred_fallthru
        _
    $region56: #{tpu_custom_call.1} parent=5 // pred_fallthru
      _
  $region6: #{tpu_custom_call.1} parent=0 // loop_footer
    %s17 = sadd.s32 1, %s13
  $region7: #{tpu_custom_call.1} parent=0 // loop_footer_branch
    %12 = sbr.rel target = $region3
  $region8: #{tpu_custom_call.1} parent=0 // loop_exit
    _

</llo_original>
